<compile_context>
chip_gen: v7x
topology: tpu7x:2x2x1
jax: 0.10.0
libtpu: 0.0.40
codegen_flags: <defaults>
</compile_context>

<pallas_src>
import jax
import jax.numpy as jnp
from jax.experimental import pallas as pl
from jax.experimental.pallas import tpu as pltpu


def _linear_kernel(x_ref, w_ref, b_ref, o_ref):
    # x_ref: (tm, E)    compute dtype (bf16 or f32)
    # w_ref: (1, E)     same compute dtype (resident across grid)
    # b_ref: (1,)       f32 scalar in SMEM
    # o_ref: (1, 1, tm) f32 lane-dense output block
    yt = jax.lax.dot_general(
        w_ref[...], x_ref[...],
        dimension_numbers=(((1,), (1,)), ((), ())),   # contract E with E -> (1, tm)
        preferred_element_type=jnp.float32,
    )
    o_ref[0] = yt + b_ref[0]


def _round_up(x, m):
    return ((x + m - 1) // m) * m


def _choose_tm(M, E, itemsize):
    """Largest row tile that (a) is a multiple of 8 (128 when possible, for
    lane-dense stores), (b) keeps one x buffer around <= 8 MiB (safe on v7x's
    64 MiB VMEM once double-buffered), and (c) doesn't exceed 2048 rows or the
    8-rounded problem size."""
    per_buffer_cap = 8 * 1024 * 1024
    cap_by_vmem = max(per_buffer_cap // max(E * itemsize, 1), 8)
    tm = min(2048, cap_by_vmem, _round_up(M, 8))
    if tm >= 128:
        tm -= tm % 128
    else:
        tm -= tm % 8
    return max(tm, 8)


def discriminator_forward(inp, weight, bias):
    """
    inp:    (..., E)  input (bf16/f32); semantics mirror nn.Linear on f32-cast input
    weight: (1, E)    f32 nn.Linear weight
    bias:   (1,)      f32 nn.Linear bias
    returns (..., 1)  float32
    """
    E = inp.shape[-1]
    lead = inp.shape[:-1]
    M = 1
    for d in lead:
        M *= d

    # MXU consumes bf16 natively with f32 accumulation -> feed it straight in.
    # For any other dtype fall back to f32, matching PyTorch's .type(torch.float32).
    compute_dtype = jnp.bfloat16 if inp.dtype == jnp.bfloat16 else jnp.float32
    itemsize = 2 if compute_dtype == jnp.bfloat16 else 4

    x2d = inp.reshape(M, E).astype(compute_dtype)
    w = weight.reshape(1, E).astype(compute_dtype)
    b = bias.reshape(1).astype(jnp.float32)

    tm = _choose_tm(M, E, itemsize)
    grid = pl.cdiv(M, tm)
    m_pad = grid * tm
    if m_pad != M:
        x2d = jnp.pad(x2d, ((0, m_pad - M), (0, 0)))

    # Double-buffered x tile + weight + output blocks, with headroom.
    vmem_limit = int(min(48 * 1024 * 1024,
                         max(16 * 1024 * 1024,
                             2 * tm * E * itemsize + 4 * 1024 * 1024)))

    out = pl.pallas_call(
        _linear_kernel,
        out_shape=jax.ShapeDtypeStruct((grid, 1, tm), jnp.float32),
        grid_spec=pltpu.PrefetchScalarGridSpec(
            num_scalar_prefetch=0,
            grid=(grid,),
            in_specs=[
                pl.BlockSpec((tm, E), lambda i: (i, 0)),             # x row tile
                pl.BlockSpec((1, E), lambda i: (0, 0)),              # weight (resident)
                pl.BlockSpec(memory_space=pltpu.MemorySpace.SMEM),   # bias scalar
            ],
            out_specs=pl.BlockSpec((1, 1, tm), lambda i: (i, 0, 0)),
        ),
        compiler_params=pltpu.CompilerParams(
            dimension_semantics=("parallel",),
            vmem_limit_bytes=vmem_limit,
        ),
    )(x2d, w, b)

    return out.reshape(m_pad)[:M].reshape(*lead, 1)


if __name__ == "__main__":
    # Small shapes consistent with the module: batch=2, seq=8, embedding=32.
    batch, seq, emb = 2, 8, 32

    key = jax.random.PRNGKey(0)
    k_x, k_w, k_b = jax.random.split(key, 3)

    # Deterministic "token embedding" input (bf16 to exercise the direct-MXU path).
    x = jax.random.normal(k_x, (batch, seq, emb), dtype=jnp.bfloat16)

    # Deterministic Linear(emb, 1) params (PyTorch-style uniform(-1/sqrt(E), 1/sqrt(E))).
    bound = 1.0 / (emb ** 0.5)
    weight = jax.random.uniform(k_w, (1, emb), jnp.float32, -bound, bound)
    bias = jax.random.uniform(k_b, (1,), jnp.float32, -bound, bound)

    y = discriminator_forward(x, weight, bias)
    y = jax.block_until_ready(y)

    # Reference with PyTorch semantics (cast input to f32, f32 matmul).
    ref = x.astype(jnp.float32) @ weight.T + bias
    assert y.shape == (batch, seq, 1), y.shape
    # Tolerance covers bf16 rounding of the weight on the direct-MXU path.
    assert jnp.allclose(y, ref, atol=2e-2, rtol=2e-2), float(jnp.max(jnp.abs(y - ref)))

    print("KERNEL_OK")
</pallas_src>

<mosaic_0001>
module attributes {stable_mosaic.version = 11 : i64} {
  func.func @_linear_kernel(%arg0: i32, %arg1: memref<16x32xbf16, #tpu.memory_space<vmem>>, %arg2: memref<1x32xbf16, #tpu.memory_space<vmem>>, %arg3: memref<1xf32, #tpu.memory_space<smem>>, %arg4: memref<1x1x16xf32, #tpu.memory_space<vmem>>) attributes {dimension_semantics = [#tpu.dimension_semantics<parallel>], iteration_bounds = array<i64: 1>, scalar_prefetch = 0 : i64, scratch_operands = 0 : i64, tpu.core_type = #tpu.core_type<tc>, window_params = [{transform_indices = @transform_0, window_bounds = array<i64: 16, 32>}, {pipeline_mode = #tpu.pipeline_mode<synchronous>, transform_indices = @transform_1, window_bounds = array<i64: 1, 32>}, {transform_indices = @transform_2, window_bounds = array<i64: 1>}, {transform_indices = @transform_3, window_bounds = array<i64: 1, 1, 16>}]} {
    %c0 = arith.constant 0 : index
    %c0_0 = arith.constant 0 : index
    %0 = vector.load %arg2[%c0, %c0_0] : memref<1x32xbf16, #tpu.memory_space<vmem>>, vector<1x32xbf16>
    %c0_1 = arith.constant 0 : index
    %c0_2 = arith.constant 0 : index
    %1 = vector.load %arg1[%c0_1, %c0_2] : memref<16x32xbf16, #tpu.memory_space<vmem>>, vector<16x32xbf16>
    %cst = arith.constant dense<0.000000e+00> : vector<1x16xf32>
    %2 = tpu.matmul %0, %1, %cst {dimension_numbers = #tpu.dot_dimension_numbers<[1], [1], [0], [0], [0, 0, 1, 0], [], []>} : vector<1x32xbf16>, vector<16x32xbf16>, vector<1x16xf32> -> vector<1x16xf32>
    %c0_3 = arith.constant 0 : index
    %3 = memref.load %arg3[%c0_3] : memref<1xf32, #tpu.memory_space<smem>>
    %4 = vector.broadcast %3 : f32 to vector<1x16xf32>
    %5 = arith.addf %2, %4 : vector<1x16xf32>
    %c0_4 = arith.constant 0 : index
    %c0_5 = arith.constant 0 : index
    %c0_6 = arith.constant 0 : index
    %6 = vector.load %arg4[%c0_4, %c0_5, %c0_6] : memref<1x1x16xf32, #tpu.memory_space<vmem>>, vector<1x1x16xf32>
    %7 = vector.shape_cast %6 : vector<1x1x16xf32> to vector<1x16xf32>
    %8 = vector.shape_cast %5 : vector<1x16xf32> to vector<1x1x16xf32>
    tpu.vector_store %arg4[%c0_4, %c0_5, %c0_6], %8 {strides = array<i32>} : memref<1x1x16xf32, #tpu.memory_space<vmem>>, vector<1x1x16xf32>,
    return
  }
  func.func @transform_0(%arg0: i32) -> (i32, i32) {
    %c0_i32 = arith.constant 0 : i32
    %c0_i32_0 = arith.constant 0 : i32
    return %arg0, %c0_i32 : i32, i32
  }
  func.func @transform_1(%arg0: i32) -> (i32, i32) {
    %c0_i32 = arith.constant 0 : i32
    %c0_i32_0 = arith.constant 0 : i32
    %c0_i32_1 = arith.constant 0 : i32
    return %c0_i32, %c0_i32_0 : i32, i32
  }
  func.func @transform_2(%arg0: i32) -> i32 {
    %c0_i32 = arith.constant 0 : i32
    %c0_i32_0 = arith.constant 0 : i32
    return %c0_i32 : i32
  }
  func.func @transform_3(%arg0: i32) -> (i32, i32, i32) {
    %c0_i32 = arith.constant 0 : i32
    %c0_i32_0 = arith.constant 0 : i32
    %c0_i32_1 = arith.constant 0 : i32
    return %arg0, %c0_i32, %c0_i32_0 : i32, i32, i32
  }
}

</mosaic_0001>

<llo_original>
// kernel: tpu_custom_call.1
$region0: #{tpu_custom_call.1}
  #allocation0 [shape = 'u32[]', space=smem, size = 0x4, offset = 0x4, fixed_abs, tag = 'smem constant byte address 0x4 - core index']
  #allocation1 [shape = 'u32[144,128]{1,0:T(1,128)}', space=vmem, size = 0x12000, scoped, tag = 'internal scratch']
  #allocation2 [shape = 'f32[1]{0:T(128)S(6)}', space=smem, size = 0x200, scoped, tag = 'scoped memory for tpu_custom_call.1']
  %s0 = inlined_call_operand.hbm [shape: bf16[16,32], index: 0, kind: input, shape index: {}]
  %s1 = inlined_call_operand.vmem [shape: bf16[1,32], index: 1, kind: input, shape index: {}]
  %s2 = inlined_call_operand.<no memory space> [shape: f32[1], index: 2, kind: input, shape index: {}]
  %s3 = inlined_call_operand.hbm [shape: f32[1,1,16], index: 3, kind: output, shape index: {}]
  %s4 = sld [smem:[#allocation0]]
  $region26: #{tpu_custom_call.1} parent=0
    _
  %s6 = ssub.s32 1, %s4
  %s7 = scalar_select 0, %s6, %s4
  %8 = sst [smem:[#allocation2]] %s2
  $region1: #{tpu_custom_call.1} parent=0
    #allocation3 [shape = 'u8[4096]{0}', space=vmem, size = 0x1000, scoped, tag = 'input window, operand 0, single buffered']
    #allocation4 [shape = 's32[1]{0}', space=sflag, size = 0x4, scoped, tag = 'scoped memory for tpu_custom_call.1']
    #allocation5 [shape = 's32[1]{0}', space=sflag, size = 0x4, scoped, tag = 'scoped memory for tpu_custom_call.1']
    #allocation6 [shape = 'u8[512]{0}', space=vmem, size = 0x400, scoped, tag = 'output window, operand 0, single buffered']
    %9 = vsyncpa [#allocation4], 0
    %10 = vsyncpa [#allocation5], 0
    // Predicated region
    $region2: #{tpu_custom_call.1} parent=1 // pred_check
      _
    $region3: #{tpu_custom_call.1} parent=1 // pred_check_branch
      %12 = sbr.rel (0) target = $region5
    $region4: #{tpu_custom_call.1} parent=1 // pred_region
      %s14 = ssub.s32 128, 128
      %15 = vsyncadd [#allocation4], %s14
      %s16 = sshll.u32 [#allocation3], 4
      %s17 = int_to_ptr.vmem [resolvable:$true] %s16
      %22 = dma.hbm_to_vmem [thread:$0]  %s0, 128, %s17, [#allocation4], 64, 64, 4
    $region5: #{tpu_custom_call.1} parent=1 // pred_fallthru
      _
    // Predicated region
    $region6: #{tpu_custom_call.1} parent=1 // pred_check
      _
    $region7: #{tpu_custom_call.1} parent=1 // pred_check_branch
      %24 = sbr.rel (0) target = $region9
    $region8: #{tpu_custom_call.1} parent=1 // pred_region
      _
    $region9: #{tpu_custom_call.1} parent=1 // pred_fallthru
      _
    // Predicated region
    $region10: #{tpu_custom_call.1} parent=1 // pred_check
      _
    $region11: #{tpu_custom_call.1} parent=1 // pred_check_branch
      %26 = sbr.rel (0) target = $region13
    $region12: #{tpu_custom_call.1} parent=1 // pred_region
      _
    $region13: #{tpu_custom_call.1} parent=1 // pred_fallthru
      _
    // Predicated region
    $region14: #{tpu_custom_call.1} parent=1 // pred_check
      _
    $region15: #{tpu_custom_call.1} parent=1 // pred_check_branch
      %28 = sbr.rel (0) target = $region17
    $region16: #{tpu_custom_call.1} parent=1 // pred_region
      %29 = dma.done [#allocation4], 128
    $region17: #{tpu_custom_call.1} parent=1 // pred_fallthru
      _
    %v31 = vld [vmem:[%s1] sm:$0x1]
    %v32 = vld [vmem:[#allocation3] sm:$0xf]
    %v33 = vld [vmem:[#allocation3 + $0x4] sm:$0xf]
    %s34 = sld [smem:[#allocation2]]
    %v35 = vstv %s34
    %v38 = vunpack.c.l.b16 %v32
    %v39 = vunpack.c.l.b16 %v33
    %v40 = vpack.c.b16 %v39, %v38
    %vm41 = vcmask 261120
    %v43 = vsel %vm41, %v31, 0
    %v46 = vsel %vm41, %v40, 0
    %48 = vmatprep.subr.bf16.mxu0 0
    %49 = vmatpush1.bf16.xpose.msra.mxu0 %v46
    %50 = vmatprep.subr.bf16.mxu0 0
    %51 = vmatpush1.bf16.xpose.msra.mxu0 0
    %52 = vmatprep.subr.bf16.mxu0 0
    %53 = vmatpush1.bf16.xpose.msra.mxu0 0
    %54 = vmatprep.subr.bf16.mxu0 0
    %55 = vmatpush1.bf16.xpose.msra.mxu0 0
    %56 = vmatprep.subr.bf16.mxu0 0
    %57 = vmatpush1.bf16.xpose.msra.mxu0 0
    %58 = vmatprep.subr.bf16.mxu0 0
    %59 = vmatpush1.bf16.xpose.msra.mxu0 0
    %60 = vmatprep.subr.bf16.mxu0 0
    %61 = vmatpush1.bf16.xpose.msra.mxu0 0
    %62 = vmatprep.subr.bf16.mxu0 0
    %63 = vmatpush1.bf16.xpose.msra.mxu0 0
    %64 = vmatprep.subr.bf16.mxu0 0
    %65 = vmatpush1.bf16.xpose.msra.mxu0 0
    %66 = vmatprep.subr.bf16.mxu0 0
    %67 = vmatpush1.bf16.xpose.msra.mxu0 0
    %68 = vmatprep.subr.bf16.mxu0 0
    %69 = vmatpush1.bf16.xpose.msra.mxu0 0
    %70 = vmatprep.subr.bf16.mxu0 0
    %71 = vmatpush1.bf16.xpose.msra.mxu0 0
    %72 = vmatprep.subr.bf16.mxu0 0
    %73 = vmatpush1.bf16.xpose.msra.mxu0 0
    %74 = vmatprep.subr.bf16.mxu0 0
    %75 = vmatpush1.bf16.xpose.msra.mxu0 0
    %76 = vmatprep.subr.bf16.mxu0 0
    %77 = vmatpush1.bf16.xpose.msra.mxu0 0
    %78 = vmatprep.subr.bf16.mxu0 0
    %79 = vmatpush1.bf16.xpose.msra.mxu0 0
    %80 = vmatprep.mubr.bf16.mxu0 0
    %81 = vmatmul.mubr.bf16.gmra.mrb[0].mxu0 %v43
    %v82 = vpop.f32.mrb[0].mxu0
    %v83 = vadd.f32 %v35, %v82
    %v84 = vpop.f32.mrb[0].mxu0
    %v85 = vpop.f32.mrb[0].mxu0
    %v86 = vpop.f32.mrb[0].mxu0
    %87 = vdwg.mxu0
    %vm88 = vcmask 122880
    %89 = vst.msk [vmem:[#allocation6] sm:$0x1] %vm88, %v83
    // Predicated region
    $region18: #{tpu_custom_call.1} parent=1 // pred_check
      _
    $region19: #{tpu_custom_call.1} parent=1 // pred_check_branch
      %91 = sbr.rel (0) target = $region21
    $region20: #{tpu_custom_call.1} parent=1 // pred_region
      %s93 = ssub.s32 16, 16
      %94 = vsyncadd [#allocation5], %s93
      %s96 = sshll.u32 [#allocation6], 4
      %s97 = int_to_ptr.vmem [resolvable:$true] %s96
      %99 = dma.vmem_to_hbm [thread:$0]  %s97, 16, %s3, [#allocation5]
    $region21: #{tpu_custom_call.1} parent=1 // pred_fallthru
      _
    // Predicated region
    $region22: #{tpu_custom_call.1} parent=1 // pred_check
      _
    $region23: #{tpu_custom_call.1} parent=1 // pred_check_branch
      %101 = sbr.rel (0) target = $region25
    $region24: #{tpu_custom_call.1} parent=1 // pred_region
      %102 = dma.done [#allocation5], 16
    $region25: #{tpu_custom_call.1} parent=1 // pred_fallthru
      _
    %103 = vsyncpa [#allocation4], 1
    %104 = vsyncpa [#allocation5], 1

</llo_original>
